<compile_context>
chip_gen: v7x
topology: tpu7x:2x2x1
jax: 0.10.0
libtpu: 0.0.40
codegen_flags: <defaults>
</compile_context>

<pallas_src>
import jax
import jax.numpy as jnp
from jax.experimental import pallas as pl
from jax.experimental.pallas import tpu as pltpu


LATENT_DIM_Z = 10
HIDDEN_DIM_PROP = 50
NUM_PROP = 2

_LANES = 128
_TB_MAX = 2048          # batch rows per grid step (upper bound)


def _round_up(x, m):
    return ((x + m - 1) // m) * m


# ----------------------------------------------------------------------------
# Kernel factory.  One fused matmul chain per batch tile.
#   z_ref   : (TB, Dz)           f32 VMEM   (streamed batch tile)
#   w1_ref  : (Dz, PH_pad)       f32 VMEM   fused Linear1 weights (VMEM-resident)
#   b1_ref  : (1, PH_pad)        f32 VMEM
#   w2_ref  : (P_sub, PH_pad)    f32 VMEM   row p = spectral-normed Linear2 of prop p
#   b2_ref  : (P_sub, 1)         f32 VMEM
#   out_ref : (P_sub, TB)        f32 VMEM   transposed, lane-dense output tile
# ----------------------------------------------------------------------------
def _make_decoder_y_kernel(relu_rows, num_prop):
    relu_rows = tuple(relu_rows)

    def kernel(z_ref, w1_ref, b1_ref, w2_ref, b2_ref, out_ref):
        z = z_ref[...]                                               # (TB, Dz)
        # Fused first layer for all properties + ReLU.
        h = jnp.dot(z, w1_ref[...], preferred_element_type=jnp.float32)
        h = jnp.maximum(h + b1_ref[...], 0.0)                        # (TB, PH_pad)
        # Second layer, emitted already transposed:
        #   y[p, b] = sum_k w2[p, k] * h[b, k]    (contract on last dims, NT form)
        y = jax.lax.dot_general(
            w2_ref[...], h,
            dimension_numbers=(((1,), (1,)), ((), ())),
            preferred_element_type=jnp.float32)                      # (P_sub, TB)
        y = y + b2_ref[...]
        # Output activation per property, resolved at trace time.
        if len(relu_rows) == 0:
            out = jax.nn.sigmoid(y)
        elif len(relu_rows) == num_prop:
            out = jnp.maximum(y, 0.0)
        else:
            rows = jax.lax.broadcasted_iota(jnp.int32, y.shape, 0)
            is_relu = rows == relu_rows[0]
            for r in relu_rows[1:]:
                is_relu = jnp.logical_or(is_relu, rows == r)
            out = jnp.where(is_relu, jnp.maximum(y, 0.0), jax.nn.sigmoid(y))
        out_ref[...] = out
    return kernel


# ----------------------------------------------------------------------------
# Parameter setup (plain JAX, runs once at init — NOT on the forward path)
# ----------------------------------------------------------------------------
def _spectral_normalize(w, n_iter=30):
    """Normalize w (out, in) by its top singular value via power iteration.

    Mirrors torch.nn.utils spectral_norm applied to a Linear weight.  For a
    (1, hidden) weight sigma equals the row L2 norm, so this matches torch.
    """
    u = jnp.ones((w.shape[0],), jnp.float32) / jnp.sqrt(w.shape[0])
    v = w.T @ u
    for _ in range(n_iter):
        v = w.T @ u
        v = v / (jnp.linalg.norm(v) + 1e-12)
        u = w @ v
        u = u / (jnp.linalg.norm(u) + 1e-12)
    sigma = u @ (w @ v)
    return w / sigma


def init_params(key, latent_dim_z=LATENT_DIM_Z, hidden=HIDDEN_DIM_PROP,
                num_prop=NUM_PROP):
    """Deterministic synthetic parameters (PyTorch-Linear-style uniform init)."""
    w1s, b1s, w2s, b2s = [], [], [], []
    for _ in range(num_prop):
        key, k1, k2, k3, k4 = jax.random.split(key, 5)
        lim1 = 1.0 / jnp.sqrt(latent_dim_z)
        lim2 = 1.0 / jnp.sqrt(hidden)
        w1 = jax.random.uniform(k1, (hidden, latent_dim_z), jnp.float32, -lim1, lim1)
        b1 = jax.random.uniform(k2, (hidden,), jnp.float32, -lim1, lim1)
        w2 = jax.random.uniform(k3, (1, hidden), jnp.float32, -lim2, lim2)
        b2 = jax.random.uniform(k4, (1,), jnp.float32, -lim2, lim2)
        w2 = _spectral_normalize(w2)          # spectral_norm_fc on the 2nd Linear
        # store transposed (in, out) so the reference/kernel right-multiply
        w1s.append(w1.T)                      # (Dz, H)
        b1s.append(b1)                        # (H,)
        w2s.append(w2.T)                      # (H, 1)
        b2s.append(b2)                        # (1,)
    return (jnp.stack(w1s), jnp.stack(b1s), jnp.stack(w2s), jnp.stack(b2s))


def pack_decoder_y_params(params):
    """Fuse + pad per-property weights into lane-dense kernel operands.

    Call ONCE at init; the result is reused by every forward call.
    """
    w1, b1, w2, b2 = params
    P, Dz, H = w1.shape
    PH = P * H
    PH_pad = _round_up(PH, _LANES)
    P_sub = _round_up(P, 8)                   # output sublane padding (f32)

    # First layer: (Dz, P*H); columns idx*H:(idx+1)*H belong to property idx.
    w1_flat = jnp.transpose(w1, (1, 0, 2)).reshape(Dz, PH)
    w1_flat = jnp.pad(w1_flat, ((0, 0), (0, PH_pad - PH)))
    b1_flat = jnp.pad(b1.reshape(PH), (0, PH_pad - PH)).reshape(1, PH_pad)

    # Second layer: (P_sub, PH_pad); row p holds w2[p] in its own column block.
    w2_rows = jnp.zeros((P_sub, PH_pad), jnp.float32)
    for idx in range(P):
        w2_rows = w2_rows.at[idx, idx * H:(idx + 1) * H].set(w2[idx, :, 0])
    b2_col = jnp.zeros((P_sub, 1), jnp.float32).at[:P, 0].set(b2[:, 0])

    # Static output-activation choice per property (matches the PyTorch __init__).
    relu_rows = tuple(idx for idx in range(P) if (P - idx) == 4)

    return {
        "w1": w1_flat, "b1": b1_flat, "w2": w2_rows, "b2": b2_col,
        "P": P, "P_sub": P_sub, "PH_pad": PH_pad, "Dz": Dz,
        "relu_rows": relu_rows,
    }


# ----------------------------------------------------------------------------
# Wrapper
# ----------------------------------------------------------------------------
def _choose_batch_tile(B):
    if B < 1024:
        # single grid step; exact tile when B is sublane-aligned, otherwise a
        # lane-multiple block with boundary clipping on the last (only) block
        return B if B % 8 == 0 else _round_up(B, 128)
    # >= 2 grid steps so the "parallel" batch axis spans both v7x TensorCores,
    # while keeping per-step tiles large (>= 512 rows) to amortize step overhead
    return min(_TB_MAX, _round_up(pl.cdiv(B, 2), 128))


def decoder_csvae_y_forward(z, packed):
    """z: (B, latent_dim_z) f32 -> (B, num_prop) f32."""
    B, Dz = z.shape
    assert Dz == packed["Dz"], (Dz, packed["Dz"])
    P, P_sub, PH_pad = packed["P"], packed["P_sub"], packed["PH_pad"]

    TB = _choose_batch_tile(B)
    grid = (pl.cdiv(B, TB),)
    resident = lambda i: (0, 0)   # weights/biases stay VMEM-resident across the grid

    kernel = _make_decoder_y_kernel(packed["relu_rows"], P)

    out_t = pl.pallas_call(
        kernel,
        out_shape=jax.ShapeDtypeStruct((P_sub, B), jnp.float32),
        grid=grid,
        in_specs=[
            pl.BlockSpec((TB, Dz), lambda i: (i, 0)),        # z (streamed)
            pl.BlockSpec((Dz, PH_pad), resident),            # fused W1
            pl.BlockSpec((1, PH_pad), resident),             # fused b1
            pl.BlockSpec((P_sub, PH_pad), resident),         # packed spectral-normed W2
            pl.BlockSpec((P_sub, 1), resident),              # packed b2
        ],
        out_specs=pl.BlockSpec((P_sub, TB), lambda i: (0, i)),
        compiler_params=pltpu.CompilerParams(
            dimension_semantics=("parallel",),               # megacore on v7x
        ),
    )(z, packed["w1"], packed["b1"], packed["w2"], packed["b2"])

    # Tiny (P, B) -> (B, P) layout fixup; ~8 B/row of extra HBM traffic.
    return out_t[:P, :].T


def decoder_csvae_y_ref(z, params):
    """Plain-JAX reference for correctness checking."""
    w1, b1, w2, b2 = params
    num_prop = w1.shape[0]
    outs = []
    for idx in range(num_prop):
        h = jnp.maximum(z @ w1[idx] + b1[idx], 0.0)
        y = h @ w2[idx] + b2[idx]
        if (num_prop - idx) == 4:
            y = jnp.maximum(y, 0.0)
        else:
            y = jax.nn.sigmoid(y)
        outs.append(y)
    return jnp.concatenate(outs, axis=-1)


if __name__ == "__main__":
    key = jax.random.PRNGKey(0)
    kp, kz = jax.random.split(key)

    params = init_params(kp)
    packed = pack_decoder_y_params(params)        # packing hoisted out of forward

    # Small batch (single exact block).
    batch = 8
    z = jax.random.normal(kz, (batch, LATENT_DIM_Z), jnp.float32)
    out = jax.block_until_ready(decoder_csvae_y_forward(z, packed))
    ref = decoder_csvae_y_ref(z, params)
    assert out.shape == (batch, NUM_PROP), out.shape
    assert jnp.allclose(out, ref, atol=1e-5, rtol=1e-5)

    # Ragged batch -> multiple grid steps + clipped final block, no jnp.pad.
    z_big = jax.random.normal(jax.random.fold_in(kz, 1), (1037, LATENT_DIM_Z),
                              jnp.float32)
    out_big = jax.block_until_ready(decoder_csvae_y_forward(z_big, packed))
    ref_big = decoder_csvae_y_ref(z_big, params)
    assert out_big.shape == (1037, NUM_PROP)
    assert jnp.allclose(out_big, ref_big, atol=1e-5, rtol=1e-5)

    # num_prop=4 exercises the ReLU output head ((num_prop - idx) == 4 at idx 0).
    params4 = init_params(jax.random.fold_in(kp, 7), num_prop=4)
    packed4 = pack_decoder_y_params(params4)
    z4 = jax.random.normal(jax.random.fold_in(kz, 2), (64, LATENT_DIM_Z),
                           jnp.float32)
    out4 = jax.block_until_ready(decoder_csvae_y_forward(z4, packed4))
    ref4 = decoder_csvae_y_ref(z4, params4)
    assert out4.shape == (64, 4)
    assert jnp.allclose(out4, ref4, atol=1e-5, rtol=1e-5)

    print("KERNEL_OK")
</pallas_src>

<mosaic_0001>
module attributes {stable_mosaic.version = 11 : i64} {
  func.func @kernel(%arg0: i32, %arg1: memref<8x10xf32, #tpu.memory_space<vmem>>, %arg2: memref<10x128xf32, #tpu.memory_space<vmem>>, %arg3: memref<1x128xf32, #tpu.memory_space<vmem>>, %arg4: memref<8x128xf32, #tpu.memory_space<vmem>>, %arg5: memref<8x1xf32, #tpu.memory_space<vmem>>, %arg6: memref<8x8xf32, #tpu.memory_space<vmem>>) attributes {dimension_semantics = [#tpu.dimension_semantics<parallel>], iteration_bounds = array<i64: 1>, scalar_prefetch = 0 : i64, scratch_operands = 0 : i64, tpu.core_type = #tpu.core_type<tc>, window_params = [{transform_indices = @transform_0, window_bounds = array<i64: 8, 10>}, {pipeline_mode = #tpu.pipeline_mode<synchronous>, transform_indices = @transform_1, window_bounds = array<i64: 10, 128>}, {pipeline_mode = #tpu.pipeline_mode<synchronous>, transform_indices = @transform_2, window_bounds = array<i64: 1, 128>}, {pipeline_mode = #tpu.pipeline_mode<synchronous>, transform_indices = @transform_3, window_bounds = array<i64: 8, 128>}, {pipeline_mode = #tpu.pipeline_mode<synchronous>, transform_indices = @transform_4, window_bounds = array<i64: 8, 1>}, {transform_indices = @transform_5, window_bounds = array<i64: 8, 8>}]} {
    %c0 = arith.constant 0 : index
    %c0_0 = arith.constant 0 : index
    %0 = vector.load %arg1[%c0, %c0_0] : memref<8x10xf32, #tpu.memory_space<vmem>>, vector<8x10xf32>
    %c0_1 = arith.constant 0 : index
    %c0_2 = arith.constant 0 : index
    %1 = vector.load %arg2[%c0_1, %c0_2] : memref<10x128xf32, #tpu.memory_space<vmem>>, vector<10x128xf32>
    %cst = arith.constant dense<0.000000e+00> : vector<8x128xf32>
    %2 = tpu.matmul %0, %1, %cst {dimension_numbers = #tpu.dot_dimension_numbers<[1], [0], [0], [1], [0, 0, 1, 1], [], []>} : vector<8x10xf32>, vector<10x128xf32>, vector<8x128xf32> -> vector<8x128xf32>
    %c0_3 = arith.constant 0 : index
    %c0_4 = arith.constant 0 : index
    %3 = vector.load %arg3[%c0_3, %c0_4] : memref<1x128xf32, #tpu.memory_space<vmem>>, vector<1x128xf32>
    %4 = vector.broadcast %3 : vector<1x128xf32> to vector<8x128xf32>
    %5 = arith.addf %2, %4 : vector<8x128xf32>
    %cst_5 = arith.constant 0.000000e+00 : f32
    %6 = vector.broadcast %cst_5 : f32 to vector<8x128xf32>
    %7 = arith.maximumf %5, %6 : vector<8x128xf32>
    %c0_6 = arith.constant 0 : index
    %c0_7 = arith.constant 0 : index
    %8 = vector.load %arg4[%c0_6, %c0_7] : memref<8x128xf32, #tpu.memory_space<vmem>>, vector<8x128xf32>
    %cst_8 = arith.constant dense<0.000000e+00> : vector<8x8xf32>
    %9 = tpu.matmul %8, %7, %cst_8 {dimension_numbers = #tpu.dot_dimension_numbers<[1], [1], [0], [0], [0, 0, 1, 0], [], []>} : vector<8x128xf32>, vector<8x128xf32>, vector<8x8xf32> -> vector<8x8xf32>
    %c0_9 = arith.constant 0 : index
    %c0_10 = arith.constant 0 : index
    %10 = vector.load %arg5[%c0_9, %c0_10] : memref<8x1xf32, #tpu.memory_space<vmem>>, vector<8x1xf32>
    %11 = vector.broadcast %10 : vector<8x1xf32> to vector<8x8xf32>
    %12 = arith.addf %9, %11 : vector<8x8xf32>
    %13 = arith.negf %12 : vector<8x8xf32>
    %14 = math.exp %13 : vector<8x8xf32>
    %cst_11 = arith.constant 1.000000e+00 : f32
    %15 = vector.broadcast %cst_11 : f32 to vector<8x8xf32>
    %16 = arith.addf %15, %14 : vector<8x8xf32>
    %17 = arith.divf %15, %16 : vector<8x8xf32>
    %c0_12 = arith.constant 0 : index
    %c0_13 = arith.constant 0 : index
    %18 = vector.load %arg6[%c0_12, %c0_13] : memref<8x8xf32, #tpu.memory_space<vmem>>, vector<8x8xf32>
    tpu.vector_store %arg6[%c0_12, %c0_13], %17 {strides = array<i32>} : memref<8x8xf32, #tpu.memory_space<vmem>>, vector<8x8xf32>,
    return
  }
  func.func @transform_0(%arg0: i32) -> (i32, i32) {
    %c0_i32 = arith.constant 0 : i32
    %c0_i32_0 = arith.constant 0 : i32
    return %arg0, %c0_i32 : i32, i32
  }
  func.func @transform_1(%arg0: i32) -> (i32, i32) {
    %c0_i32 = arith.constant 0 : i32
    %c0_i32_0 = arith.constant 0 : i32
    %c0_i32_1 = arith.constant 0 : i32
    return %c0_i32, %c0_i32_0 : i32, i32
  }
  func.func @transform_2(%arg0: i32) -> (i32, i32) {
    %c0_i32 = arith.constant 0 : i32
    %c0_i32_0 = arith.constant 0 : i32
    %c0_i32_1 = arith.constant 0 : i32
    return %c0_i32, %c0_i32_0 : i32, i32
  }
  func.func @transform_3(%arg0: i32) -> (i32, i32) {
    %c0_i32 = arith.constant 0 : i32
    %c0_i32_0 = arith.constant 0 : i32
    %c0_i32_1 = arith.constant 0 : i32
    return %c0_i32, %c0_i32_0 : i32, i32
  }
  func.func @transform_4(%arg0: i32) -> (i32, i32) {
    %c0_i32 = arith.constant 0 : i32
    %c0_i32_0 = arith.constant 0 : i32
    %c0_i32_1 = arith.constant 0 : i32
    return %c0_i32, %c0_i32_0 : i32, i32
  }
  func.func @transform_5(%arg0: i32) -> (i32, i32) {
    %c0_i32 = arith.constant 0 : i32
    %c0_i32_0 = arith.constant 0 : i32
    return %c0_i32, %arg0 : i32, i32
  }
}

</mosaic_0001>

<llo_original>
// kernel: tpu_custom_call.1
$region0: #{tpu_custom_call.1}
  #allocation0 [shape = 'u32[]', space=smem, size = 0x4, offset = 0x4, fixed_abs, tag = 'smem constant byte address 0x4 - core index']
  #allocation1 [shape = 'u32[144,128]{1,0:T(1,128)}', space=vmem, size = 0x12000, scoped, tag = 'internal scratch']
  %s0 = inlined_call_operand.vmem [shape: f32[8,10], index: 0, kind: input, shape index: {}]
  %s1 = inlined_call_operand.hbm [shape: f32[10,128], index: 1, kind: input, shape index: {}]
  %s2 = inlined_call_operand.hbm [shape: f32[1,128], index: 2, kind: input, shape index: {}]
  %s3 = inlined_call_operand.vmem [shape: f32[8,128], index: 3, kind: input, shape index: {}]
  %s4 = inlined_call_operand.vmem [shape: f32[8,1], index: 4, kind: input, shape index: {}]
  %s5 = inlined_call_operand.hbm [shape: f32[8,8], index: 5, kind: output, shape index: {}]
  %s6 = sld [smem:[#allocation0]]
  $region38: #{tpu_custom_call.1} parent=0
    _
  %s8 = ssub.s32 1, %s6
  %s9 = scalar_select 0, %s8, %s6
  $region1: #{tpu_custom_call.1} parent=0
    #allocation2 [shape = 'u8[8192]{0}', space=vmem, size = 0x2000, scoped, tag = 'input window, operand 1, single buffered']
    #allocation3 [shape = 's32[1]{0}', space=sflag, size = 0x4, scoped, tag = 'scoped memory for tpu_custom_call.1']
    #allocation4 [shape = 's32[1]{0}', space=sflag, size = 0x4, scoped, tag = 'scoped memory for tpu_custom_call.1']
    #allocation5 [shape = 'u8[512]{0}', space=vmem, size = 0x400, scoped, tag = 'input window, operand 2, single buffered']
    #allocation6 [shape = 's32[1]{0}', space=sflag, size = 0x4, scoped, tag = 'scoped memory for tpu_custom_call.1']
    #allocation7 [shape = 'u8[4096]{0}', space=vmem, size = 0x1000, scoped, tag = 'output window, operand 0, single buffered']
    %10 = vsyncpa [#allocation3], 0
    %11 = vsyncpa [#allocation6], 0
    %12 = vsyncpa [#allocation4], 0
    // Predicated region
    $region2: #{tpu_custom_call.1} parent=1 // pred_check
      _
    $region3: #{tpu_custom_call.1} parent=1 // pred_check_branch
      %14 = sbr.rel (0) target = $region5
    $region4: #{tpu_custom_call.1} parent=1 // pred_region
      _
    $region5: #{tpu_custom_call.1} parent=1 // pred_fallthru
      _
    // Predicated region
    $region6: #{tpu_custom_call.1} parent=1 // pred_check
      _
    $region7: #{tpu_custom_call.1} parent=1 // pred_check_branch
      %16 = sbr.rel (0) target = $region9
    $region8: #{tpu_custom_call.1} parent=1 // pred_region
      %s18 = ssub.s32 256, 256
      %19 = vsyncadd [#allocation3], %s18
      %s20 = sshll.u32 [#allocation2], 4
      %s21 = int_to_ptr.vmem [resolvable:$true] %s20
      %26 = dma.hbm_to_vmem [thread:$0]  %s1, 256, %s21, [#allocation3], 128, 128, 8
    $region9: #{tpu_custom_call.1} parent=1 // pred_fallthru
      _
    // Predicated region
    $region10: #{tpu_custom_call.1} parent=1 // pred_check
      _
    $region11: #{tpu_custom_call.1} parent=1 // pred_check_branch
      %28 = sbr.rel (0) target = $region13
    $region12: #{tpu_custom_call.1} parent=1 // pred_region
      %s30 = ssub.s32 16, 16
      %31 = vsyncadd [#allocation6], %s30
      %s33 = sshll.u32 [#allocation5], 4
      %s34 = int_to_ptr.vmem [resolvable:$true] %s33
      %36 = dma.hbm_to_vmem [thread:$0]  %s2, 16, %s34, [#allocation6]
    $region13: #{tpu_custom_call.1} parent=1 // pred_fallthru
      _
    // Predicated region
    $region14: #{tpu_custom_call.1} parent=1 // pred_check
      _
    $region15: #{tpu_custom_call.1} parent=1 // pred_check_branch
      %38 = sbr.rel (0) target = $region17
    $region16: #{tpu_custom_call.1} parent=1 // pred_region
      _
    $region17: #{tpu_custom_call.1} parent=1 // pred_fallthru
      _
    // Predicated region
    $region18: #{tpu_custom_call.1} parent=1 // pred_check
      _
    $region19: #{tpu_custom_call.1} parent=1 // pred_check_branch
      %40 = sbr.rel (0) target = $region21
    $region20: #{tpu_custom_call.1} parent=1 // pred_region
      _
    $region21: #{tpu_custom_call.1} parent=1 // pred_fallthru
      _
    // Predicated region
    $region22: #{tpu_custom_call.1} parent=1 // pred_check
      _
    $region23: #{tpu_custom_call.1} parent=1 // pred_check_branch
      %42 = sbr.rel (0) target = $region25
    $region24: #{tpu_custom_call.1} parent=1 // pred_region
      %43 = dma.done [#allocation3], 256
    $region25: #{tpu_custom_call.1} parent=1 // pred_fallthru
      _
    // Predicated region
    $region26: #{tpu_custom_call.1} parent=1 // pred_check
      _
    $region27: #{tpu_custom_call.1} parent=1 // pred_check_branch
      %45 = sbr.rel (0) target = $region29
    $region28: #{tpu_custom_call.1} parent=1 // pred_region
      %46 = dma.done [#allocation6], 16
    $region29: #{tpu_custom_call.1} parent=1 // pred_fallthru
      _
    %v47 = vld [vmem:[%s0] sm:$0xff]
    %v48 = vld [vmem:[#allocation2] sm:$0xff]
    %v49 = vld [vmem:[#allocation2 + $0x8] sm:$0x3]
    %v50 = vld [vmem:[#allocation5] sm:$0x1]
    %v52 = vlaneseq
    %v53 = vshrl.u32 %v52, 7
    %v54 = vsub.s32 0, %v53
    %v55 = vrot.slane %v50, %v54
    %vm57 = vcmask 80896
    %v59 = vsel %vm57, %v47, 0
    %vm61 = vcmask 1041408
    %v63 = vsel %vm61, %v49, 0
    %65 = vmatprep.subr.mxu0 0.0
    %66 = vmatpush1.msra.mxu0 %v48
    %67 = vmatprep.subr.mxu0 0.0
    %68 = vmatpush1.msra.mxu0 %v63
    %69 = vmatprep.subr.mxu0 0.0
    %70 = vmatpush1.msra.mxu0 0.0
    %71 = vmatprep.subr.mxu0 0.0
    %72 = vmatpush1.msra.mxu0 0.0
    %73 = vmatprep.subr.mxu0 0.0
    %74 = vmatpush1.msra.mxu0 0.0
    %75 = vmatprep.subr.mxu0 0.0
    %76 = vmatpush1.msra.mxu0 0.0
    %77 = vmatprep.subr.mxu0 0.0
    %78 = vmatpush1.msra.mxu0 0.0
    %79 = vmatprep.subr.mxu0 0.0
    %80 = vmatpush1.msra.mxu0 0.0
    %81 = vmatprep.subr.mxu0 0.0
    %82 = vmatpush1.msra.mxu0 0.0
    %83 = vmatprep.subr.mxu0 0.0
    %84 = vmatpush1.msra.mxu0 0.0
    %85 = vmatprep.subr.mxu0 0.0
    %86 = vmatpush1.msra.mxu0 0.0
    %87 = vmatprep.subr.mxu0 0.0
    %88 = vmatpush1.msra.mxu0 0.0
    %89 = vmatprep.subr.mxu0 0.0
    %90 = vmatpush1.msra.mxu0 0.0
    %91 = vmatprep.subr.mxu0 0.0
    %92 = vmatpush1.msra.mxu0 0.0
    %93 = vmatprep.subr.mxu0 0.0
    %94 = vmatpush1.msra.mxu0 0.0
    %95 = vmatprep.subr.mxu0 0.0
    %96 = vmatpush1.msra.mxu0 0.0
    %97 = vmatprep.subr.mxu0 0.0
    %98 = vmatpush1.msra.mxu0 0.0
    %99 = vmatprep.subr.mxu0 0.0
    %100 = vmatpush1.msra.mxu0 0.0
    %101 = vmatprep.subr.mxu0 0.0
    %102 = vmatpush1.msra.mxu0 0.0
    %103 = vmatprep.subr.mxu0 0.0
    %104 = vmatpush1.msra.mxu0 0.0
    %105 = vmatprep.subr.mxu0 0.0
    %106 = vmatpush1.msra.mxu0 0.0
    %107 = vmatprep.subr.mxu0 0.0
    %108 = vmatpush1.msra.mxu0 0.0
    %109 = vmatprep.subr.mxu0 0.0
    %110 = vmatpush1.msra.mxu0 0.0
    %111 = vmatprep.subr.mxu0 0.0
    %112 = vmatpush1.msra.mxu0 0.0
    %113 = vmatprep.subr.mxu0 0.0
    %114 = vmatpush1.msra.mxu0 0.0
    %115 = vmatprep.subr.mxu0 0.0
    %116 = vmatpush1.msra.mxu0 0.0
    %117 = vmatprep.subr.mxu0 0.0
    %118 = vmatpush1.msra.mxu0 0.0
    %119 = vmatprep.subr.mxu0 0.0
    %120 = vmatpush1.msra.mxu0 0.0
    %121 = vmatprep.subr.mxu0 0.0
    %122 = vmatpush1.msra.mxu0 0.0
    %123 = vmatprep.subr.mxu0 0.0
    %124 = vmatpush1.msra.mxu0 0.0
    %125 = vmatprep.subr.mxu0 0.0
    %126 = vmatpush1.msra.mxu0 0.0
    %127 = vmatprep.subr.mxu0 0.0
    %128 = vmatpush1.msra.mxu0 0.0
    %129 = vmatprep.mubr.f32.mxu0 0.0
    %130 = vmatmul.mubr.f32.gmra.mrb[0].mxu0 %v59
    %v131 = vpop.f32.mrb[0].mxu0
    %v132 = vadd.f32 %v55, %v131
    %v133 = vpop.f32.mrb[0].mxu0
    %134 = vdwg.mxu0
    %v135 = vmax.f32 %v132, 0.0
    %v136 = vld [vmem:[%s3] sm:$0xff]
    %v137 = vld [vmem:[%s4] sm:$0xff]
    %139 = vset.pattern.permute.xlu0 0
    %140 = vperm.xlu0 %139, %v137
    %v141 = vpop.permute.xlu0 %140
    %143 = vmatprep.subr.mxu0 0.0
    %144 = vmatpush1.xpose.msra.mxu0 %v135
    %145 = vmatprep.subr.mxu0 0.0
    %146 = vmatpush1.xpose.msra.mxu0 0.0
    %147 = vmatprep.subr.mxu0 0.0
    %148 = vmatpush1.xpose.msra.mxu0 0.0
    %149 = vmatprep.subr.mxu0 0.0
    %150 = vmatpush1.xpose.msra.mxu0 0.0
    %151 = vmatprep.subr.mxu0 0.0
    %152 = vmatpush1.xpose.msra.mxu0 0.0
    %153 = vmatprep.subr.mxu0 0.0
    %154 = vmatpush1.xpose.msra.mxu0 0.0
    %155 = vmatprep.subr.mxu0 0.0
    %156 = vmatpush1.xpose.msra.mxu0 0.0
    %157 = vmatprep.subr.mxu0 0.0
    %158 = vmatpush1.xpose.msra.mxu0 0.0
    %159 = vmatprep.subr.mxu0 0.0
    %160 = vmatpush1.xpose.msra.mxu0 0.0
    %161 = vmatprep.subr.mxu0 0.0
    %162 = vmatpush1.xpose.msra.mxu0 0.0
    %163 = vmatprep.subr.mxu0 0.0
    %164 = vmatpush1.xpose.msra.mxu0 0.0
    %165 = vmatprep.subr.mxu0 0.0
    %166 = vmatpush1.xpose.msra.mxu0 0.0
    %167 = vmatprep.subr.mxu0 0.0
    %168 = vmatpush1.xpose.msra.mxu0 0.0
    %169 = vmatprep.subr.mxu0 0.0
    %170 = vmatpush1.xpose.msra.mxu0 0.0
    %171 = vmatprep.subr.mxu0 0.0
    %172 = vmatpush1.xpose.msra.mxu0 0.0
    %173 = vmatprep.subr.mxu0 0.0
    %174 = vmatpush1.xpose.msra.mxu0 0.0
    %175 = vmatprep.subr.mxu0 0.0
    %176 = vmatpush1.xpose.msra.mxu0 0.0
    %177 = vmatprep.subr.mxu0 0.0
    %178 = vmatpush1.xpose.msra.mxu0 0.0
    %179 = vmatprep.subr.mxu0 0.0
    %180 = vmatpush1.xpose.msra.mxu0 0.0
    %181 = vmatprep.subr.mxu0 0.0
    %182 = vmatpush1.xpose.msra.mxu0 0.0
    %183 = vmatprep.subr.mxu0 0.0
    %184 = vmatpush1.xpose.msra.mxu0 0.0
    %185 = vmatprep.subr.mxu0 0.0
    %186 = vmatpush1.xpose.msra.mxu0 0.0
    %187 = vmatprep.subr.mxu0 0.0
    %188 = vmatpush1.xpose.msra.mxu0 0.0
    %189 = vmatprep.subr.mxu0 0.0
    %190 = vmatpush1.xpose.msra.mxu0 0.0
    %191 = vmatprep.subr.mxu0 0.0
    %192 = vmatpush1.xpose.msra.mxu0 0.0
    %193 = vmatprep.subr.mxu0 0.0
    %194 = vmatpush1.xpose.msra.mxu0 0.0
    %195 = vmatprep.subr.mxu0 0.0
    %196 = vmatpush1.xpose.msra.mxu0 0.0
    %197 = vmatprep.subr.mxu0 0.0
    %198 = vmatpush1.xpose.msra.mxu0 0.0
    %199 = vmatprep.subr.mxu0 0.0
    %200 = vmatpush1.xpose.msra.mxu0 0.0
    %201 = vmatprep.subr.mxu0 0.0
    %202 = vmatpush1.xpose.msra.mxu0 0.0
    %203 = vmatprep.subr.mxu0 0.0
    %204 = vmatpush1.xpose.msra.mxu0 0.0
    %205 = vmatprep.subr.mxu0 0.0
    %206 = vmatpush1.xpose.msra.mxu0 0.0
    %207 = vmatprep.mubr.f32.mxu0 0.0
    %208 = vmatmul.mubr.f32.gmra.mrb[0].mxu0 %v136
    %v209 = vpop.f32.mrb[0].mxu0
    %v210 = vadd.f32 %v141, %v209
    %v211 = vpop.f32.mrb[0].mxu0
    %212 = vdwg.mxu0
    %v213 = vxor.u32 %v210, 2147483648
    %v214 = vmul.f32 %v213, 1.442695
    %v215 = vpow.pop %v214
    %v216 = vadd.f32 %v215, 1.0
    %v217 = vrcp.pop %v216
    %v218 = vmul.f32 1.0, %v217
    %vm219 = vcmask 64512
    %220 = vst.msk [vmem:[#allocation7] sm:$0xff] %vm219, %v218
    // Predicated region
    $region30: #{tpu_custom_call.1} parent=1 // pred_check
      _
    $region31: #{tpu_custom_call.1} parent=1 // pred_check_branch
      %222 = sbr.rel (0) target = $region33
    $region32: #{tpu_custom_call.1} parent=1 // pred_region
      %s224 = ssub.s32 128, 128
      %225 = vsyncadd [#allocation4], %s224
      %s227 = sshll.u32 [#allocation7], 4
      %s228 = int_to_ptr.vmem [resolvable:$true] %s227
      %230 = dma.vmem_to_hbm [thread:$0]  %s228, 128, %s5, [#allocation4]
    $region33: #{tpu_custom_call.1} parent=1 // pred_fallthru
      _
    // Predicated region
    $region34: #{tpu_custom_call.1} parent=1 // pred_check
      _
    $region35: #{tpu_custom_call.1} parent=1 // pred_check_branch
      %232 = sbr.rel (0) target = $region37
    $region36: #{tpu_custom_call.1} parent=1 // pred_region
      %233 = dma.done [#allocation4], 128
    $region37: #{tpu_custom_call.1} parent=1 // pred_fallthru
      _
    %234 = vsyncpa [#allocation3], 1
    %235 = vsyncpa [#allocation6], 1
    %236 = vsyncpa [#allocation4], 1

</llo_original>
